<compile_context>
chip_gen: v5e
topology: v5e:2x2
jax: 0.10.0
libtpu: 0.0.40
codegen_flags: <defaults>
</compile_context>

<pallas_src>
import functools

import jax
import jax.numpy as jnp
from jax.experimental import pallas as pl
from jax.experimental.pallas import tpu as pltpu


def _round_up(x, m):
    return ((x + m - 1) // m) * m


# ---------------------------------------------------------------------------
# Single fused Pallas kernel: the entire Linear+BN(+LeakyReLU) stack
# ---------------------------------------------------------------------------
def _encoder_stack_kernel(*refs, relu_flags, n_valid, eps, mxu_dtype):
    """refs = (x_ref, w0, gamma0, beta0, w1, gamma1, beta1, ..., o_ref)."""
    x_ref = refs[0]
    o_ref = refs[-1]
    layer_refs = refs[1:-1]
    n_layers = len(relu_flags)

    h = x_ref[...]                                   # (B_pad, D0_pad), f32
    b_pad = h.shape[0]
    inv_n = jnp.float32(1.0 / n_valid)

    # Mask padded batch rows out of the BN statistics (only materialized if padding exists).
    if n_valid != b_pad:
        row_ids = jax.lax.broadcasted_iota(jnp.int32, (b_pad, 1), 0)
        row_mask = (row_ids < n_valid).astype(jnp.float32)      # (B_pad, 1)
    else:
        row_mask = None

    # Static Python loop -> fully unrolled; intermediates never leave VMEM.
    for li in range(n_layers):
        w = layer_refs[3 * li][...]                  # (D_in_pad, D_out_pad)
        gamma = layer_refs[3 * li + 1][...]          # (1, D_out_pad)
        beta = layer_refs[3 * li + 2][...]           # (1, D_out_pad)

        # Linear (bias omitted: cancelled by BN). MXU matmul with f32 accumulation.
        if mxu_dtype != jnp.float32:
            lhs = h.astype(mxu_dtype)
            rhs = w.astype(mxu_dtype)
        else:
            lhs, rhs = h, w
        h = jnp.dot(lhs, rhs, preferred_element_type=jnp.float32)   # (B_pad, D_out_pad)

        # BatchNorm1d (training semantics), single-pass sum / sum-of-squares.
        hm = h if row_mask is None else h * row_mask
        s = jnp.sum(hm, axis=0, keepdims=True)                      # (1, D_out_pad)
        ss = jnp.sum(hm * h, axis=0, keepdims=True)                 # (1, D_out_pad)
        mean = s * inv_n
        var = jnp.maximum(ss * inv_n - mean * mean, 0.0)            # biased variance
        y = (h - mean) * jax.lax.rsqrt(var + eps) * gamma + beta

        if relu_flags[li]:
            y = jnp.where(y >= 0.0, y, 0.1 * y)                     # LeakyReLU(0.1)
        h = y

    o_ref[...] = h.astype(o_ref.dtype)


# ---------------------------------------------------------------------------
# Parameter construction (deterministic, mirrors nn.Module shapes; padded to lanes)
# ---------------------------------------------------------------------------
def _make_layer_params(key, d_in, d_out, d_in_pad, d_out_pad, param_dtype):
    # PyTorch nn.Linear default init: U(-1/sqrt(d_in), 1/sqrt(d_in)) on the weight.
    # The Linear bias is NOT materialized: BatchNorm's mean subtraction cancels it exactly.
    bound = 1.0 / (d_in ** 0.5)
    w = jax.random.uniform(key, (d_in, d_out), jnp.float32, -bound, bound)
    w_pad = jnp.zeros((d_in_pad, d_out_pad), param_dtype)
    w_pad = w_pad.at[:d_in, :d_out].set(w.astype(param_dtype))
    # BatchNorm1d affine: gamma=1, beta=0 on real features; BOTH 0 on padded columns so the
    # padded outputs are exactly 0 (var=0 there would otherwise amplify via rsqrt(eps)).
    gamma = jnp.zeros((1, d_out_pad), jnp.float32).at[:, :d_out].set(1.0)
    beta = jnp.zeros((1, d_out_pad), jnp.float32)
    return w_pad, gamma, beta


def make_transformer_encoder_params(key, num_input_dim, hidden_size, num_layers, output_dim,
                                    *, param_dtype=jnp.float32):
    d_in_pad = _round_up(num_input_dim, 128)
    h_pad = _round_up(hidden_size, 128)
    out_pad = _round_up(output_dim, 128)

    dims, relu_flags = [], []
    dims.append((num_input_dim, hidden_size, d_in_pad, h_pad)); relu_flags.append(True)
    for _ in range(num_layers):
        dims.append((hidden_size, hidden_size, h_pad, h_pad)); relu_flags.append(True)
    dims.append((hidden_size, hidden_size, h_pad, h_pad)); relu_flags.append(False)   # enc tail
    dims.append((hidden_size, output_dim, h_pad, out_pad)); relu_flags.append(False)  # fc

    keys = jax.random.split(key, len(dims))
    layers = [_make_layer_params(k, di, do, dip, dop, param_dtype)
              for k, (di, do, dip, dop) in zip(keys, dims)]
    return {
        "layers": layers,
        "dims": [(di, do) for (di, do, _, _) in dims],
        "relu_flags": relu_flags,
        "num_input_dim": num_input_dim,
        "output_dim": output_dim,
    }


# ---------------------------------------------------------------------------
# Wrapper: pad, run the single fused pallas_call, slice back
# ---------------------------------------------------------------------------
def transformer_encoder_forward(params, x, *, mxu_dtype=jnp.float32):
    """emb = fc(enc(x)) as one fused Pallas kernel. x: (B, num_input_dim) float32."""
    layers = params["layers"]
    relu_flags = tuple(params["relu_flags"])
    d_in = params["num_input_dim"]
    d_out = params["output_dim"]

    batch = x.shape[0]
    b_pad = _round_up(batch, 8)
    d_in_pad = layers[0][0].shape[0]
    d_out_pad = layers[-1][0].shape[1]

    x_pad = jnp.zeros((b_pad, d_in_pad), jnp.float32)
    x_pad = x_pad.at[:batch, :d_in].set(x.astype(jnp.float32))

    flat_params = []
    for (w, g, b) in layers:
        flat_params += [w, g, b]

    # Advisory scheduling cost for the single fused custom call.
    flops = 0
    bytes_accessed = x_pad.size * 4 + b_pad * d_out_pad * 4
    for (w, g, b) in layers:
        flops += 2 * b_pad * w.shape[0] * w.shape[1]
        bytes_accessed += w.size * w.dtype.itemsize + (g.size + b.size) * 4
    transcendentals = len(layers) * d_out_pad  # one rsqrt per feature per layer

    kernel = functools.partial(
        _encoder_stack_kernel,
        relu_flags=relu_flags,
        n_valid=batch,
        eps=1e-5,
        mxu_dtype=mxu_dtype,
    )

    vmem_spec = pl.BlockSpec(memory_space=pltpu.MemorySpace.VMEM)
    out_pad = pl.pallas_call(
        kernel,
        out_shape=jax.ShapeDtypeStruct((b_pad, d_out_pad), jnp.float32),
        in_specs=[vmem_spec] * (1 + len(flat_params)),
        out_specs=vmem_spec,
        cost_estimate=pl.CostEstimate(
            flops=flops, transcendentals=transcendentals, bytes_accessed=bytes_accessed
        ),
    )(x_pad, *flat_params)

    return out_pad[:batch, :d_out]


# ---------------------------------------------------------------------------
# Pure-JAX reference (unpadded math) for a correctness spot-check
# ---------------------------------------------------------------------------
def _reference_forward(params, x):
    h = x.astype(jnp.float32)
    for (w_pad, gamma, beta), (d_in, d_out), use_relu in zip(
            params["layers"], params["dims"], params["relu_flags"]):
        w = w_pad[:d_in, :d_out].astype(jnp.float32)
        h = jnp.dot(h, w, precision=jax.lax.Precision.HIGHEST)
        mean = jnp.mean(h, axis=0, keepdims=True)
        var = jnp.mean((h - mean) ** 2, axis=0, keepdims=True)
        h = (h - mean) * jax.lax.rsqrt(var + 1e-5) * gamma[:, :d_out] + beta[:, :d_out]
        if use_relu:
            h = jnp.where(h >= 0.0, h, 0.1 * h)
    return h


# ---------------------------------------------------------------------------
# Demo
# ---------------------------------------------------------------------------
if __name__ == "__main__":
    # Small shapes consistent with the module's (batch, num_input_dim) input.
    # BATCH=6 deliberately exercises the sublane padding + masked-BN-statistics path.
    BATCH = 6
    NUM_INPUT_DIM = 64
    HIDDEN_SIZE = 32
    NUM_LAYERS = 2
    OUTPUT_DIM = 48

    root = jax.random.PRNGKey(0)
    k_params, k_x = jax.random.split(root)

    params = make_transformer_encoder_params(
        k_params, NUM_INPUT_DIM, HIDDEN_SIZE, NUM_LAYERS, OUTPUT_DIM
    )
    x = jax.random.normal(k_x, (BATCH, NUM_INPUT_DIM), jnp.float32)

    emb = transformer_encoder_forward(params, x)
    emb = jax.block_until_ready(emb)

    assert emb.shape == (BATCH, OUTPUT_DIM), emb.shape
    assert emb.dtype == jnp.float32
    assert bool(jnp.all(jnp.isfinite(emb)))

    ref = _reference_forward(params, x)
    assert bool(jnp.allclose(emb, ref, atol=1e-2, rtol=1e-2)), (
        float(jnp.max(jnp.abs(emb - ref)))
    )

    print("KERNEL_OK")
</pallas_src>

<mosaic_0001>
module attributes {stable_mosaic.version = 11 : i64} {
  func.func @_encoder_stack_kernel(%arg0: memref<8x128xf32, #tpu.memory_space<vmem>>, %arg1: memref<128x128xf32, #tpu.memory_space<vmem>>, %arg2: memref<1x128xf32, #tpu.memory_space<vmem>>, %arg3: memref<1x128xf32, #tpu.memory_space<vmem>>, %arg4: memref<128x128xf32, #tpu.memory_space<vmem>>, %arg5: memref<1x128xf32, #tpu.memory_space<vmem>>, %arg6: memref<1x128xf32, #tpu.memory_space<vmem>>, %arg7: memref<128x128xf32, #tpu.memory_space<vmem>>, %arg8: memref<1x128xf32, #tpu.memory_space<vmem>>, %arg9: memref<1x128xf32, #tpu.memory_space<vmem>>, %arg10: memref<128x128xf32, #tpu.memory_space<vmem>>, %arg11: memref<1x128xf32, #tpu.memory_space<vmem>>, %arg12: memref<1x128xf32, #tpu.memory_space<vmem>>, %arg13: memref<128x128xf32, #tpu.memory_space<vmem>>, %arg14: memref<1x128xf32, #tpu.memory_space<vmem>>, %arg15: memref<1x128xf32, #tpu.memory_space<vmem>>, %arg16: memref<8x128xf32, #tpu.memory_space<vmem>>) attributes {dimension_semantics = [], scalar_prefetch = 0 : i64, scratch_operands = 0 : i64, tpu.core_type = #tpu.core_type<tc>} {
    %c0 = arith.constant 0 : index
    %c0_0 = arith.constant 0 : index
    %0 = vector.load %arg0[%c0, %c0_0] : memref<8x128xf32, #tpu.memory_space<vmem>>, vector<8x128xf32>
    %1 = tpu.iota {dimensions = array<i32: 0>} : vector<8x1xi32>
    %c6_i32 = arith.constant 6 : i32
    %2 = vector.broadcast %c6_i32 : i32 to vector<8x1xi32>
    %3 = arith.cmpi slt, %1, %2 : vector<8x1xi32>
    %4 = arith.extui %3 : vector<8x1xi1> to vector<8x1xi32>
    %5 = arith.sitofp %4 : vector<8x1xi32> to vector<8x1xf32>
    %c0_1 = arith.constant 0 : index
    %c0_2 = arith.constant 0 : index
    %6 = vector.load %arg1[%c0_1, %c0_2] : memref<128x128xf32, #tpu.memory_space<vmem>>, vector<128x128xf32>
    %c0_3 = arith.constant 0 : index
    %c0_4 = arith.constant 0 : index
    %7 = vector.load %arg2[%c0_3, %c0_4] : memref<1x128xf32, #tpu.memory_space<vmem>>, vector<1x128xf32>
    %c0_5 = arith.constant 0 : index
    %c0_6 = arith.constant 0 : index
    %8 = vector.load %arg3[%c0_5, %c0_6] : memref<1x128xf32, #tpu.memory_space<vmem>>, vector<1x128xf32>
    %cst = arith.constant dense<0.000000e+00> : vector<8x128xf32>
    %9 = tpu.matmul %0, %6, %cst {dimension_numbers = #tpu.dot_dimension_numbers<[1], [0], [0], [1], [0, 0, 1, 1], [], []>} : vector<8x128xf32>, vector<128x128xf32>, vector<8x128xf32> -> vector<8x128xf32>
    %10 = vector.broadcast %5 : vector<8x1xf32> to vector<8x128xf32>
    %11 = arith.mulf %9, %10 : vector<8x128xf32>
    %cst_7 = arith.constant dense<0.000000e+00> : vector<128xf32>
    %12 = vector.multi_reduction <add>, %11, %cst_7 [0] : vector<8x128xf32> to vector<128xf32>
    %13 = vector.shape_cast %12 : vector<128xf32> to vector<1x128xf32>
    %14 = arith.mulf %11, %9 : vector<8x128xf32>
    %cst_8 = arith.constant dense<0.000000e+00> : vector<128xf32>
    %15 = vector.multi_reduction <add>, %14, %cst_8 [0] : vector<8x128xf32> to vector<128xf32>
    %16 = vector.shape_cast %15 : vector<128xf32> to vector<1x128xf32>
    %cst_9 = arith.constant 0.166666672 : f32
    %17 = vector.broadcast %cst_9 : f32 to vector<1x128xf32>
    %18 = arith.mulf %13, %17 : vector<1x128xf32>
    %cst_10 = arith.constant 0.166666672 : f32
    %19 = vector.broadcast %cst_10 : f32 to vector<1x128xf32>
    %20 = arith.mulf %16, %19 : vector<1x128xf32>
    %21 = arith.mulf %18, %18 : vector<1x128xf32>
    %22 = arith.subf %20, %21 : vector<1x128xf32>
    %cst_11 = arith.constant 0.000000e+00 : f32
    %23 = vector.broadcast %cst_11 : f32 to vector<1x128xf32>
    %24 = arith.maximumf %22, %23 : vector<1x128xf32>
    %25 = vector.broadcast %18 : vector<1x128xf32> to vector<8x128xf32>
    %26 = arith.subf %9, %25 : vector<8x128xf32>
    %cst_12 = arith.constant 9.99999974E-6 : f32
    %27 = vector.broadcast %cst_12 : f32 to vector<1x128xf32>
    %28 = arith.addf %24, %27 : vector<1x128xf32>
    %29 = math.rsqrt %28 : vector<1x128xf32>
    %30 = vector.broadcast %29 : vector<1x128xf32> to vector<8x128xf32>
    %31 = arith.mulf %26, %30 : vector<8x128xf32>
    %32 = vector.broadcast %7 : vector<1x128xf32> to vector<8x128xf32>
    %33 = arith.mulf %31, %32 : vector<8x128xf32>
    %34 = vector.broadcast %8 : vector<1x128xf32> to vector<8x128xf32>
    %35 = arith.addf %33, %34 : vector<8x128xf32>
    %cst_13 = arith.constant 0.000000e+00 : f32
    %36 = vector.broadcast %cst_13 : f32 to vector<8x128xf32>
    %37 = arith.cmpf oge, %35, %36 : vector<8x128xf32>
    %cst_14 = arith.constant 1.000000e-01 : f32
    %38 = vector.broadcast %cst_14 : f32 to vector<8x128xf32>
    %39 = arith.mulf %38, %35 : vector<8x128xf32>
    %40 = arith.select %37, %35, %39 : vector<8x128xi1>, vector<8x128xf32>
    %c0_15 = arith.constant 0 : index
    %c0_16 = arith.constant 0 : index
    %41 = vector.load %arg4[%c0_15, %c0_16] : memref<128x128xf32, #tpu.memory_space<vmem>>, vector<128x128xf32>
    %c0_17 = arith.constant 0 : index
    %c0_18 = arith.constant 0 : index
    %42 = vector.load %arg5[%c0_17, %c0_18] : memref<1x128xf32, #tpu.memory_space<vmem>>, vector<1x128xf32>
    %c0_19 = arith.constant 0 : index
    %c0_20 = arith.constant 0 : index
    %43 = vector.load %arg6[%c0_19, %c0_20] : memref<1x128xf32, #tpu.memory_space<vmem>>, vector<1x128xf32>
    %cst_21 = arith.constant dense<0.000000e+00> : vector<8x128xf32>
    %44 = tpu.matmul %40, %41, %cst_21 {dimension_numbers = #tpu.dot_dimension_numbers<[1], [0], [0], [1], [0, 0, 1, 1], [], []>} : vector<8x128xf32>, vector<128x128xf32>, vector<8x128xf32> -> vector<8x128xf32>
    %45 = vector.broadcast %5 : vector<8x1xf32> to vector<8x128xf32>
    %46 = arith.mulf %44, %45 : vector<8x128xf32>
    %cst_22 = arith.constant dense<0.000000e+00> : vector<128xf32>
    %47 = vector.multi_reduction <add>, %46, %cst_22 [0] : vector<8x128xf32> to vector<128xf32>
    %48 = vector.shape_cast %47 : vector<128xf32> to vector<1x128xf32>
    %49 = arith.mulf %46, %44 : vector<8x128xf32>
    %cst_23 = arith.constant dense<0.000000e+00> : vector<128xf32>
    %50 = vector.multi_reduction <add>, %49, %cst_23 [0] : vector<8x128xf32> to vector<128xf32>
    %51 = vector.shape_cast %50 : vector<128xf32> to vector<1x128xf32>
    %cst_24 = arith.constant 0.166666672 : f32
    %52 = vector.broadcast %cst_24 : f32 to vector<1x128xf32>
    %53 = arith.mulf %48, %52 : vector<1x128xf32>
    %cst_25 = arith.constant 0.166666672 : f32
    %54 = vector.broadcast %cst_25 : f32 to vector<1x128xf32>
    %55 = arith.mulf %51, %54 : vector<1x128xf32>
    %56 = arith.mulf %53, %53 : vector<1x128xf32>
    %57 = arith.subf %55, %56 : vector<1x128xf32>
    %cst_26 = arith.constant 0.000000e+00 : f32
    %58 = vector.broadcast %cst_26 : f32 to vector<1x128xf32>
    %59 = arith.maximumf %57, %58 : vector<1x128xf32>
    %60 = vector.broadcast %53 : vector<1x128xf32> to vector<8x128xf32>
    %61 = arith.subf %44, %60 : vector<8x128xf32>
    %cst_27 = arith.constant 9.99999974E-6 : f32
    %62 = vector.broadcast %cst_27 : f32 to vector<1x128xf32>
    %63 = arith.addf %59, %62 : vector<1x128xf32>
    %64 = math.rsqrt %63 : vector<1x128xf32>
    %65 = vector.broadcast %64 : vector<1x128xf32> to vector<8x128xf32>
    %66 = arith.mulf %61, %65 : vector<8x128xf32>
    %67 = vector.broadcast %42 : vector<1x128xf32> to vector<8x128xf32>
    %68 = arith.mulf %66, %67 : vector<8x128xf32>
    %69 = vector.broadcast %43 : vector<1x128xf32> to vector<8x128xf32>
    %70 = arith.addf %68, %69 : vector<8x128xf32>
    %cst_28 = arith.constant 0.000000e+00 : f32
    %71 = vector.broadcast %cst_28 : f32 to vector<8x128xf32>
    %72 = arith.cmpf oge, %70, %71 : vector<8x128xf32>
    %cst_29 = arith.constant 1.000000e-01 : f32
    %73 = vector.broadcast %cst_29 : f32 to vector<8x128xf32>
    %74 = arith.mulf %73, %70 : vector<8x128xf32>
    %75 = arith.select %72, %70, %74 : vector<8x128xi1>, vector<8x128xf32>
    %c0_30 = arith.constant 0 : index
    %c0_31 = arith.constant 0 : index
    %76 = vector.load %arg7[%c0_30, %c0_31] : memref<128x128xf32, #tpu.memory_space<vmem>>, vector<128x128xf32>
    %c0_32 = arith.constant 0 : index
    %c0_33 = arith.constant 0 : index
    %77 = vector.load %arg8[%c0_32, %c0_33] : memref<1x128xf32, #tpu.memory_space<vmem>>, vector<1x128xf32>
    %c0_34 = arith.constant 0 : index
    %c0_35 = arith.constant 0 : index
    %78 = vector.load %arg9[%c0_34, %c0_35] : memref<1x128xf32, #tpu.memory_space<vmem>>, vector<1x128xf32>
    %cst_36 = arith.constant dense<0.000000e+00> : vector<8x128xf32>
    %79 = tpu.matmul %75, %76, %cst_36 {dimension_numbers = #tpu.dot_dimension_numbers<[1], [0], [0], [1], [0, 0, 1, 1], [], []>} : vector<8x128xf32>, vector<128x128xf32>, vector<8x128xf32> -> vector<8x128xf32>
    %80 = vector.broadcast %5 : vector<8x1xf32> to vector<8x128xf32>
    %81 = arith.mulf %79, %80 : vector<8x128xf32>
    %cst_37 = arith.constant dense<0.000000e+00> : vector<128xf32>
    %82 = vector.multi_reduction <add>, %81, %cst_37 [0] : vector<8x128xf32> to vector<128xf32>
    %83 = vector.shape_cast %82 : vector<128xf32> to vector<1x128xf32>
    %84 = arith.mulf %81, %79 : vector<8x128xf32>
    %cst_38 = arith.constant dense<0.000000e+00> : vector<128xf32>
    %85 = vector.multi_reduction <add>, %84, %cst_38 [0] : vector<8x128xf32> to vector<128xf32>
    %86 = vector.shape_cast %85 : vector<128xf32> to vector<1x128xf32>
    %cst_39 = arith.constant 0.166666672 : f32
    %87 = vector.broadcast %cst_39 : f32 to vector<1x128xf32>
    %88 = arith.mulf %83, %87 : vector<1x128xf32>
    %cst_40 = arith.constant 0.166666672 : f32
    %89 = vector.broadcast %cst_40 : f32 to vector<1x128xf32>
    %90 = arith.mulf %86, %89 : vector<1x128xf32>
    %91 = arith.mulf %88, %88 : vector<1x128xf32>
    %92 = arith.subf %90, %91 : vector<1x128xf32>
    %cst_41 = arith.constant 0.000000e+00 : f32
    %93 = vector.broadcast %cst_41 : f32 to vector<1x128xf32>
    %94 = arith.maximumf %92, %93 : vector<1x128xf32>
    %95 = vector.broadcast %88 : vector<1x128xf32> to vector<8x128xf32>
    %96 = arith.subf %79, %95 : vector<8x128xf32>
    %cst_42 = arith.constant 9.99999974E-6 : f32
    %97 = vector.broadcast %cst_42 : f32 to vector<1x128xf32>
    %98 = arith.addf %94, %97 : vector<1x128xf32>
    %99 = math.rsqrt %98 : vector<1x128xf32>
    %100 = vector.broadcast %99 : vector<1x128xf32> to vector<8x128xf32>
    %101 = arith.mulf %96, %100 : vector<8x128xf32>
    %102 = vector.broadcast %77 : vector<1x128xf32> to vector<8x128xf32>
    %103 = arith.mulf %101, %102 : vector<8x128xf32>
    %104 = vector.broadcast %78 : vector<1x128xf32> to vector<8x128xf32>
    %105 = arith.addf %103, %104 : vector<8x128xf32>
    %cst_43 = arith.constant 0.000000e+00 : f32
    %106 = vector.broadcast %cst_43 : f32 to vector<8x128xf32>
    %107 = arith.cmpf oge, %105, %106 : vector<8x128xf32>
    %cst_44 = arith.constant 1.000000e-01 : f32
    %108 = vector.broadcast %cst_44 : f32 to vector<8x128xf32>
    %109 = arith.mulf %108, %105 : vector<8x128xf32>
    %110 = arith.select %107, %105, %109 : vector<8x128xi1>, vector<8x128xf32>
    %c0_45 = arith.constant 0 : index
    %c0_46 = arith.constant 0 : index
    %111 = vector.load %arg10[%c0_45, %c0_46] : memref<128x128xf32, #tpu.memory_space<vmem>>, vector<128x128xf32>
    %c0_47 = arith.constant 0 : index
    %c0_48 = arith.constant 0 : index
    %112 = vector.load %arg11[%c0_47, %c0_48] : memref<1x128xf32, #tpu.memory_space<vmem>>, vector<1x128xf32>
    %c0_49 = arith.constant 0 : index
    %c0_50 = arith.constant 0 : index
    %113 = vector.load %arg12[%c0_49, %c0_50] : memref<1x128xf32, #tpu.memory_space<vmem>>, vector<1x128xf32>
    %cst_51 = arith.constant dense<0.000000e+00> : vector<8x128xf32>
    %114 = tpu.matmul %110, %111, %cst_51 {dimension_numbers = #tpu.dot_dimension_numbers<[1], [0], [0], [1], [0, 0, 1, 1], [], []>} : vector<8x128xf32>, vector<128x128xf32>, vector<8x128xf32> -> vector<8x128xf32>
    %115 = vector.broadcast %5 : vector<8x1xf32> to vector<8x128xf32>
    %116 = arith.mulf %114, %115 : vector<8x128xf32>
    %cst_52 = arith.constant dense<0.000000e+00> : vector<128xf32>
    %117 = vector.multi_reduction <add>, %116, %cst_52 [0] : vector<8x128xf32> to vector<128xf32>
    %118 = vector.shape_cast %117 : vector<128xf32> to vector<1x128xf32>
    %119 = arith.mulf %116, %114 : vector<8x128xf32>
    %cst_53 = arith.constant dense<0.000000e+00> : vector<128xf32>
    %120 = vector.multi_reduction <add>, %119, %cst_53 [0] : vector<8x128xf32> to vector<128xf32>
    %121 = vector.shape_cast %120 : vector<128xf32> to vector<1x128xf32>
    %cst_54 = arith.constant 0.166666672 : f32
    %122 = vector.broadcast %cst_54 : f32 to vector<1x128xf32>
    %123 = arith.mulf %118, %122 : vector<1x128xf32>
    %cst_55 = arith.constant 0.166666672 : f32
    %124 = vector.broadcast %cst_55 : f32 to vector<1x128xf32>
    %125 = arith.mulf %121, %124 : vector<1x128xf32>
    %126 = arith.mulf %123, %123 : vector<1x128xf32>
    %127 = arith.subf %125, %126 : vector<1x128xf32>
    %cst_56 = arith.constant 0.000000e+00 : f32
    %128 = vector.broadcast %cst_56 : f32 to vector<1x128xf32>
    %129 = arith.maximumf %127, %128 : vector<1x128xf32>
    %130 = vector.broadcast %123 : vector<1x128xf32> to vector<8x128xf32>
    %131 = arith.subf %114, %130 : vector<8x128xf32>
    %cst_57 = arith.constant 9.99999974E-6 : f32
    %132 = vector.broadcast %cst_57 : f32 to vector<1x128xf32>
    %133 = arith.addf %129, %132 : vector<1x128xf32>
    %134 = math.rsqrt %133 : vector<1x128xf32>
    %135 = vector.broadcast %134 : vector<1x128xf32> to vector<8x128xf32>
    %136 = arith.mulf %131, %135 : vector<8x128xf32>
    %137 = vector.broadcast %112 : vector<1x128xf32> to vector<8x128xf32>
    %138 = arith.mulf %136, %137 : vector<8x128xf32>
    %139 = vector.broadcast %113 : vector<1x128xf32> to vector<8x128xf32>
    %140 = arith.addf %138, %139 : vector<8x128xf32>
    %c0_58 = arith.constant 0 : index
    %c0_59 = arith.constant 0 : index
    %141 = vector.load %arg13[%c0_58, %c0_59] : memref<128x128xf32, #tpu.memory_space<vmem>>, vector<128x128xf32>
    %c0_60 = arith.constant 0 : index
    %c0_61 = arith.constant 0 : index
    %142 = vector.load %arg14[%c0_60, %c0_61] : memref<1x128xf32, #tpu.memory_space<vmem>>, vector<1x128xf32>
    %c0_62 = arith.constant 0 : index
    %c0_63 = arith.constant 0 : index
    %143 = vector.load %arg15[%c0_62, %c0_63] : memref<1x128xf32, #tpu.memory_space<vmem>>, vector<1x128xf32>
    %cst_64 = arith.constant dense<0.000000e+00> : vector<8x128xf32>
    %144 = tpu.matmul %140, %141, %cst_64 {dimension_numbers = #tpu.dot_dimension_numbers<[1], [0], [0], [1], [0, 0, 1, 1], [], []>} : vector<8x128xf32>, vector<128x128xf32>, vector<8x128xf32> -> vector<8x128xf32>
    %145 = vector.broadcast %5 : vector<8x1xf32> to vector<8x128xf32>
    %146 = arith.mulf %144, %145 : vector<8x128xf32>
    %cst_65 = arith.constant dense<0.000000e+00> : vector<128xf32>
    %147 = vector.multi_reduction <add>, %146, %cst_65 [0] : vector<8x128xf32> to vector<128xf32>
    %148 = vector.shape_cast %147 : vector<128xf32> to vector<1x128xf32>
    %149 = arith.mulf %146, %144 : vector<8x128xf32>
    %cst_66 = arith.constant dense<0.000000e+00> : vector<128xf32>
    %150 = vector.multi_reduction <add>, %149, %cst_66 [0] : vector<8x128xf32> to vector<128xf32>
    %151 = vector.shape_cast %150 : vector<128xf32> to vector<1x128xf32>
    %cst_67 = arith.constant 0.166666672 : f32
    %152 = vector.broadcast %cst_67 : f32 to vector<1x128xf32>
    %153 = arith.mulf %148, %152 : vector<1x128xf32>
    %cst_68 = arith.constant 0.166666672 : f32
    %154 = vector.broadcast %cst_68 : f32 to vector<1x128xf32>
    %155 = arith.mulf %151, %154 : vector<1x128xf32>
    %156 = arith.mulf %153, %153 : vector<1x128xf32>
    %157 = arith.subf %155, %156 : vector<1x128xf32>
    %cst_69 = arith.constant 0.000000e+00 : f32
    %158 = vector.broadcast %cst_69 : f32 to vector<1x128xf32>
    %159 = arith.maximumf %157, %158 : vector<1x128xf32>
    %160 = vector.broadcast %153 : vector<1x128xf32> to vector<8x128xf32>
    %161 = arith.subf %144, %160 : vector<8x128xf32>
    %cst_70 = arith.constant 9.99999974E-6 : f32
    %162 = vector.broadcast %cst_70 : f32 to vector<1x128xf32>
    %163 = arith.addf %159, %162 : vector<1x128xf32>
    %164 = math.rsqrt %163 : vector<1x128xf32>
    %165 = vector.broadcast %164 : vector<1x128xf32> to vector<8x128xf32>
    %166 = arith.mulf %161, %165 : vector<8x128xf32>
    %167 = vector.broadcast %142 : vector<1x128xf32> to vector<8x128xf32>
    %168 = arith.mulf %166, %167 : vector<8x128xf32>
    %169 = vector.broadcast %143 : vector<1x128xf32> to vector<8x128xf32>
    %170 = arith.addf %168, %169 : vector<8x128xf32>
    %c0_71 = arith.constant 0 : index
    %c0_72 = arith.constant 0 : index
    %171 = vector.load %arg16[%c0_71, %c0_72] : memref<8x128xf32, #tpu.memory_space<vmem>>, vector<8x128xf32>
    tpu.vector_store %arg16[%c0_71, %c0_72], %170 {strides = array<i32>} : memref<8x128xf32, #tpu.memory_space<vmem>>, vector<8x128xf32>,
    return
  }
}

</mosaic_0001>

<llo_original>
// kernel: tpu_custom_call.1
$region0: #{tpu_custom_call.1}
  #allocation0 [shape = 'u32[]', space=smem, size = 0x4, offset = 0x4, fixed_abs, tag = 'smem constant byte address 0x4 - core index']
  #allocation1 [shape = 'u32[72,128]{1,0:T(1,128)}', space=vmem, size = 0x9000, scoped, tag = 'internal scratch']
  %s0 = inlined_call_operand.hbm [shape: f32[8,128], index: 0, kind: input, shape index: {}]
  %s1 = inlined_call_operand.hbm [shape: f32[128,128], index: 1, kind: input, shape index: {}]
  %s2 = inlined_call_operand.vmem [shape: f32[1,128], index: 2, kind: input, shape index: {}]
  %s3 = inlined_call_operand.vmem [shape: f32[1,128], index: 3, kind: input, shape index: {}]
  %s4 = inlined_call_operand.hbm [shape: f32[128,128], index: 4, kind: input, shape index: {}]
  %s5 = inlined_call_operand.vmem [shape: f32[1,128], index: 5, kind: input, shape index: {}]
  %s6 = inlined_call_operand.vmem [shape: f32[1,128], index: 6, kind: input, shape index: {}]
  %s7 = inlined_call_operand.hbm [shape: f32[128,128], index: 7, kind: input, shape index: {}]
  %s8 = inlined_call_operand.vmem [shape: f32[1,128], index: 8, kind: input, shape index: {}]
  %s9 = inlined_call_operand.vmem [shape: f32[1,128], index: 9, kind: input, shape index: {}]
  %s10 = inlined_call_operand.hbm [shape: f32[128,128], index: 10, kind: input, shape index: {}]
  %s11 = inlined_call_operand.vmem [shape: f32[1,128], index: 11, kind: input, shape index: {}]
  %s12 = inlined_call_operand.vmem [shape: f32[1,128], index: 12, kind: input, shape index: {}]
  %s13 = inlined_call_operand.hbm [shape: f32[128,128], index: 13, kind: input, shape index: {}]
  %s14 = inlined_call_operand.vmem [shape: f32[1,128], index: 14, kind: input, shape index: {}]
  %s15 = inlined_call_operand.vmem [shape: f32[1,128], index: 15, kind: input, shape index: {}]
  %s16 = inlined_call_operand.hbm [shape: f32[8,128], index: 16, kind: output, shape index: {}]
  %s17 = sld [smem:[#allocation0]]
  $region98: #{tpu_custom_call.1} parent=0
    _
  %s19 = ssub.s32 1, %s17
  %s20 = scalar_select 0, %s19, %s17
  $region1: #{tpu_custom_call.1} parent=0
    #allocation2 [shape = 'u8[4096]{0}', space=vmem, size = 0x1000, scoped, tag = 'input window, operand 0, single buffered']
    #allocation3 [shape = 's32[1]{0}', space=sflag, size = 0x4, scoped, tag = 'scoped memory for tpu_custom_call.1']
    #allocation4 [shape = 's32[1]{0}', space=sflag, size = 0x4, scoped, tag = 'scoped memory for tpu_custom_call.1']
    #allocation5 [shape = 'u8[65536]{0}', space=vmem, size = 0x10000, scoped, tag = 'input window, operand 1, single buffered']
    #allocation6 [shape = 's32[1]{0}', space=sflag, size = 0x4, scoped, tag = 'scoped memory for tpu_custom_call.1']
    #allocation7 [shape = 'u8[65536]{0}', space=vmem, size = 0x10000, scoped, tag = 'input window, operand 4, single buffered']
    #allocation8 [shape = 'u8[65536]{0}', space=vmem, size = 0x10000, scoped, tag = 'input window, operand 7, single buffered']
    #allocation9 [shape = 's32[1]{0}', space=sflag, size = 0x4, scoped, tag = 'scoped memory for tpu_custom_call.1']
    #allocation10 [shape = 'u8[65536]{0}', space=vmem, size = 0x10000, scoped, tag = 'input window, operand 10, single buffered']
    #allocation11 [shape = 'u8[65536]{0}', space=vmem, size = 0x10000, scoped, tag = 'input window, operand 13, single buffered']
    #allocation12 [shape = 's32[1]{0}', space=sflag, size = 0x4, scoped, tag = 'scoped memory for tpu_custom_call.1']
    #allocation13 [shape = 'u8[4096]{0}', space=vmem, size = 0x1000, scoped, tag = 'output window, operand 0, single buffered']
    %21 = vsyncpa [#allocation3], 0
    %22 = vsyncpa [#allocation6], 0
    %23 = vsyncpa [#allocation9], 0
    %24 = vsyncpa [#allocation12], 0
    %25 = vsyncpa [#allocation4], 0
    // Predicated region
    $region2: #{tpu_custom_call.1} parent=1 // pred_check
      _
    $region3: #{tpu_custom_call.1} parent=1 // pred_check_branch
      %27 = sbr.rel (0) target = $region5
    $region4: #{tpu_custom_call.1} parent=1 // pred_region
      %29 = vsyncadd [#allocation3], 0
      %s31 = sshll.u32 %s0, 4
      %s32 = int_to_ptr.hbm [resolvable:$true] %s31
      %s33 = sshll.u32 [#allocation2], 4
      %s34 = int_to_ptr.vmem [resolvable:$true] %s33
      %36 = dma.hbm_to_vmem [thread:$0]  %s32, 128, %s34, [#allocation3]
    $region5: #{tpu_custom_call.1} parent=1 // pred_fallthru
      _
    // Predicated region
    $region6: #{tpu_custom_call.1} parent=1 // pred_check
      _
    $region7: #{tpu_custom_call.1} parent=1 // pred_check_branch
      %38 = sbr.rel (0) target = $region9
    $region8: #{tpu_custom_call.1} parent=1 // pred_region
      %40 = vsyncadd [#allocation6], 0
      %s41 = sshll.u32 %s1, 4
      %s42 = int_to_ptr.hbm [resolvable:$true] %s41
      %s43 = sshll.u32 [#allocation5], 4
      %s44 = int_to_ptr.vmem [resolvable:$true] %s43
      %49 = dma.hbm_to_vmem [thread:$0]  %s42, 2048, %s44, [#allocation6], 128, 128, 8
    $region9: #{tpu_custom_call.1} parent=1 // pred_fallthru
      _
    // Predicated region
    $region10: #{tpu_custom_call.1} parent=1 // pred_check
      _
    $region11: #{tpu_custom_call.1} parent=1 // pred_check_branch
      %51 = sbr.rel (0) target = $region13
    $region12: #{tpu_custom_call.1} parent=1 // pred_region
      _
    $region13: #{tpu_custom_call.1} parent=1 // pred_fallthru
      _
    // Predicated region
    $region14: #{tpu_custom_call.1} parent=1 // pred_check
      _
    $region15: #{tpu_custom_call.1} parent=1 // pred_check_branch
      %53 = sbr.rel (0) target = $region17
    $region16: #{tpu_custom_call.1} parent=1 // pred_region
      _
    $region17: #{tpu_custom_call.1} parent=1 // pred_fallthru
      _
    // Predicated region
    $region18: #{tpu_custom_call.1} parent=1 // pred_check
      _
    $region19: #{tpu_custom_call.1} parent=1 // pred_check_branch
      %55 = sbr.rel (0) target = $region21
    $region20: #{tpu_custom_call.1} parent=1 // pred_region
      %57 = vsyncadd [#allocation6], 0
      %s58 = sshll.u32 %s4, 4
      %s59 = int_to_ptr.hbm [resolvable:$true] %s58
      %s60 = sshll.u32 [#allocation7], 4
      %s61 = int_to_ptr.vmem [resolvable:$true] %s60
      %66 = dma.hbm_to_vmem [thread:$0]  %s59, 2048, %s61, [#allocation6], 128, 128, 8
    $region21: #{tpu_custom_call.1} parent=1 // pred_fallthru
      _
    // Predicated region
    $region22: #{tpu_custom_call.1} parent=1 // pred_check
      _
    $region23: #{tpu_custom_call.1} parent=1 // pred_check_branch
      %68 = sbr.rel (0) target = $region25
    $region24: #{tpu_custom_call.1} parent=1 // pred_region
      _
    $region25: #{tpu_custom_call.1} parent=1 // pred_fallthru
      _
    // Predicated region
    $region26: #{tpu_custom_call.1} parent=1 // pred_check
      _
    $region27: #{tpu_custom_call.1} parent=1 // pred_check_branch
      %70 = sbr.rel (0) target = $region29
    $region28: #{tpu_custom_call.1} parent=1 // pred_region
      _
    $region29: #{tpu_custom_call.1} parent=1 // pred_fallthru
      _
    // Predicated region
    $region30: #{tpu_custom_call.1} parent=1 // pred_check
      _
    $region31: #{tpu_custom_call.1} parent=1 // pred_check_branch
      %72 = sbr.rel (0) target = $region33
    $region32: #{tpu_custom_call.1} parent=1 // pred_region
      %74 = vsyncadd [#allocation9], 0
      %s75 = sshll.u32 %s7, 4
      %s76 = int_to_ptr.hbm [resolvable:$true] %s75
      %s77 = sshll.u32 [#allocation8], 4
      %s78 = int_to_ptr.vmem [resolvable:$true] %s77
      %83 = dma.hbm_to_vmem [thread:$0]  %s76, 2048, %s78, [#allocation9], 128, 128, 8
    $region33: #{tpu_custom_call.1} parent=1 // pred_fallthru
      _
    // Predicated region
    $region34: #{tpu_custom_call.1} parent=1 // pred_check
      _
    $region35: #{tpu_custom_call.1} parent=1 // pred_check_branch
      %85 = sbr.rel (0) target = $region37
    $region36: #{tpu_custom_call.1} parent=1 // pred_region
      _
    $region37: #{tpu_custom_call.1} parent=1 // pred_fallthru
      _
    // Predicated region
    $region38: #{tpu_custom_call.1} parent=1 // pred_check
      _
    $region39: #{tpu_custom_call.1} parent=1 // pred_check_branch
      %87 = sbr.rel (0) target = $region41
    $region40: #{tpu_custom_call.1} parent=1 // pred_region
      _
    $region41: #{tpu_custom_call.1} parent=1 // pred_fallthru
      _
    // Predicated region
    $region42: #{tpu_custom_call.1} parent=1 // pred_check
      _
    $region43: #{tpu_custom_call.1} parent=1 // pred_check_branch
      %89 = sbr.rel (0) target = $region45
    $region44: #{tpu_custom_call.1} parent=1 // pred_region
      %91 = vsyncadd [#allocation9], 0
      %s92 = sshll.u32 %s10, 4
      %s93 = int_to_ptr.hbm [resolvable:$true] %s92
      %s94 = sshll.u32 [#allocation10], 4
      %s95 = int_to_ptr.vmem [resolvable:$true] %s94
      %100 = dma.hbm_to_vmem [thread:$0]  %s93, 2048, %s95, [#allocation9], 128, 128, 8
    $region45: #{tpu_custom_call.1} parent=1 // pred_fallthru
      _
    // Predicated region
    $region46: #{tpu_custom_call.1} parent=1 // pred_check
      _
    $region47: #{tpu_custom_call.1} parent=1 // pred_check_branch
      %102 = sbr.rel (0) target = $region49
    $region48: #{tpu_custom_call.1} parent=1 // pred_region
      _
    $region49: #{tpu_custom_call.1} parent=1 // pred_fallthru
      _
    // Predicated region
    $region50: #{tpu_custom_call.1} parent=1 // pred_check
      _
    $region51: #{tpu_custom_call.1} parent=1 // pred_check_branch
      %104 = sbr.rel (0) target = $region53
    $region52: #{tpu_custom_call.1} parent=1 // pred_region
      _
    $region53: #{tpu_custom_call.1} parent=1 // pred_fallthru
      _
    // Predicated region
    $region54: #{tpu_custom_call.1} parent=1 // pred_check
      _
    $region55: #{tpu_custom_call.1} parent=1 // pred_check_branch
      %106 = sbr.rel (0) target = $region57
    $region56: #{tpu_custom_call.1} parent=1 // pred_region
      %108 = vsyncadd [#allocation12], 0
      %s109 = sshll.u32 %s13, 4
      %s110 = int_to_ptr.hbm [resolvable:$true] %s109
      %s111 = sshll.u32 [#allocation11], 4
      %s112 = int_to_ptr.vmem [resolvable:$true] %s111
      %117 = dma.hbm_to_vmem [thread:$0]  %s110, 2048, %s112, [#allocation12], 128, 128, 8
    $region57: #{tpu_custom_call.1} parent=1 // pred_fallthru
      _
    // Predicated region
    $region58: #{tpu_custom_call.1} parent=1 // pred_check
      _
    $region59: #{tpu_custom_call.1} parent=1 // pred_check_branch
      %119 = sbr.rel (0) target = $region61
    $region60: #{tpu_custom_call.1} parent=1 // pred_region
      _
    $region61: #{tpu_custom_call.1} parent=1 // pred_fallthru
      _
    // Predicated region
    $region62: #{tpu_custom_call.1} parent=1 // pred_check
      _
    $region63: #{tpu_custom_call.1} parent=1 // pred_check_branch
      %121 = sbr.rel (0) target = $region65
    $region64: #{tpu_custom_call.1} parent=1 // pred_region
      _
    $region65: #{tpu_custom_call.1} parent=1 // pred_fallthru
      _
    // Predicated region
    $region66: #{tpu_custom_call.1} parent=1 // pred_check
      _
    $region67: #{tpu_custom_call.1} parent=1 // pred_check_branch
      %123 = sbr.rel (0) target = $region69
    $region68: #{tpu_custom_call.1} parent=1 // pred_region
      %125 = dma.done [#allocation3], 128
    $region69: #{tpu_custom_call.1} parent=1 // pred_fallthru
      _
    // Predicated region
    $region70: #{tpu_custom_call.1} parent=1 // pred_check
      _
    $region71: #{tpu_custom_call.1} parent=1 // pred_check_branch
      %127 = sbr.rel (0) target = $region73
    $region72: #{tpu_custom_call.1} parent=1 // pred_region
      %129 = dma.done [#allocation6], 2048
    $region73: #{tpu_custom_call.1} parent=1 // pred_fallthru
      _
    // Predicated region
    $region74: #{tpu_custom_call.1} parent=1 // pred_check
      _
    $region75: #{tpu_custom_call.1} parent=1 // pred_check_branch
      %131 = sbr.rel (0) target = $region77
    $region76: #{tpu_custom_call.1} parent=1 // pred_region
      %133 = dma.done [#allocation6], 2048
    $region77: #{tpu_custom_call.1} parent=1 // pred_fallthru
      _
    // Predicated region
    $region78: #{tpu_custom_call.1} parent=1 // pred_check
      _
    $region79: #{tpu_custom_call.1} parent=1 // pred_check_branch
      %135 = sbr.rel (0) target = $region81
    $region80: #{tpu_custom_call.1} parent=1 // pred_region
      %137 = dma.done [#allocation9], 2048
    $region81: #{tpu_custom_call.1} parent=1 // pred_fallthru
      _
    // Predicated region
    $region82: #{tpu_custom_call.1} parent=1 // pred_check
      _
    $region83: #{tpu_custom_call.1} parent=1 // pred_check_branch
      %139 = sbr.rel (0) target = $region85
    $region84: #{tpu_custom_call.1} parent=1 // pred_region
      %141 = dma.done [#allocation9], 2048
    $region85: #{tpu_custom_call.1} parent=1 // pred_fallthru
      _
    // Predicated region
    $region86: #{tpu_custom_call.1} parent=1 // pred_check
      _
    $region87: #{tpu_custom_call.1} parent=1 // pred_check_branch
      %143 = sbr.rel (0) target = $region89
    $region88: #{tpu_custom_call.1} parent=1 // pred_region
      %145 = dma.done [#allocation12], 2048
    $region89: #{tpu_custom_call.1} parent=1 // pred_fallthru
      _
    %v146 = vld [vmem:[#allocation2] sm:$0xff]
    %v147 = vlaneseq
    %v148 = vshrl.u32 %v147, 7
    %vm149 = vcmp.lt.s32.totalorder %v148, 6
    %v150 = vsel %vm149, 1, 0
    %v151 = vcvt.s32.f32 %v150
    %v152 = vld [vmem:[#allocation5] sm:$0xff]
    %v153 = vld [vmem:[#allocation5 + $0x8] sm:$0xff]
    %v154 = vld [vmem:[#allocation5 + $0x10] sm:$0xff]
    %v155 = vld [vmem:[#allocation5 + $0x18] sm:$0xff]
    %v156 = vld [vmem:[#allocation5 + $0x20] sm:$0xff]
    %v157 = vld [vmem:[#allocation5 + $0x28] sm:$0xff]
    %v158 = vld [vmem:[#allocation5 + $0x30] sm:$0xff]
    %v159 = vld [vmem:[#allocation5 + $0x38] sm:$0xff]
    %v160 = vld [vmem:[#allocation5 + $0x40] sm:$0xff]
    %v161 = vld [vmem:[#allocation5 + $0x48] sm:$0xff]
    %v162 = vld [vmem:[#allocation5 + $0x50] sm:$0xff]
    %v163 = vld [vmem:[#allocation5 + $0x58] sm:$0xff]
    %v164 = vld [vmem:[#allocation5 + $0x60] sm:$0xff]
    %v165 = vld [vmem:[#allocation5 + $0x68] sm:$0xff]
    %v166 = vld [vmem:[#allocation5 + $0x70] sm:$0xff]
    %v167 = vld [vmem:[#allocation5 + $0x78] sm:$0xff]
    %v168 = vld [vmem:[%s2] sm:$0x1]
    %v169 = vld [vmem:[%s3] sm:$0x1]
    %170 = vmatpush.msra.mxu0 %v167
    %171 = vmatpush.msra.mxu0 %v166
    %172 = vmatpush.msra.mxu0 %v165
    %173 = vmatpush.msra.mxu0 %v164
    %174 = vmatpush.msra.mxu0 %v163
    %175 = vmatpush.msra.mxu0 %v162
    %176 = vmatpush.msra.mxu0 %v161
    %177 = vmatpush.msra.mxu0 %v160
    %178 = vmatpush.msra.mxu0 %v159
    %179 = vmatpush.msra.mxu0 %v158
    %180 = vmatpush.msra.mxu0 %v157
    %181 = vmatpush.msra.mxu0 %v156
    %182 = vmatpush.msra.mxu0 %v155
    %183 = vmatpush.msra.mxu0 %v154
    %184 = vmatpush.msra.mxu0 %v153
    %185 = vmatpush.msra.mxu0 %v152
    %186 = vmatmul.f32.gmra.mxu0 %v146
    %v187 = vpop.f32.mrf.mxu0
    %v188 = vadd.f32 0.0, %v187
    %189 = vdwg.mxu0
    %v190 = vmul.f32 %v188, %v151
    %v191 = vrot.slane %v190, 4
    %v192 = vadd.f32 %v190, %v191
    %v193 = vrot.slane %v192, 2
    %v194 = vadd.f32 %v192, %v193
    %v195 = vrot.slane %v194, 1
    %v196 = vadd.f32 %v194, %v195
    %v197 = vmul.f32 %v190, %v188
    %v198 = vrot.slane %v197, 4
    %v199 = vadd.f32 %v197, %v198
    %v200 = vrot.slane %v199, 2
    %v201 = vadd.f32 %v199, %v200
    %v202 = vrot.slane %v201, 1
    %v203 = vadd.f32 %v201, %v202
    %v204 = vmul.f32 %v196, 0.16666667
    %v205 = vmul.f32 %v203, 0.16666667
    %v206 = vmul.f32 %v204, %v204
    %v207 = vsub.f32 %v205, %v206
    %v208 = vmax.f32 %v207, 0.0
    %v209 = vsub.f32 %v188, %v204
    %v210 = vadd.f32 %v208, 1e-05
    %v211 = vrsqrt.pop %v210
    %v212 = vmul.f32 %v211, %v210
    %v213 = vmul.f32 %v212, %v211
    %v214 = vmul.f32 0.5, %v213
    %v215 = vsub.f32 1.5, %v214
    %v216 = vmul.f32 %v211, %v215
    %vm217 = vweird.f32 %v210
    %vm218 = vweird.f32 %v211
    %vm219 = vmor %vm217, %vm218
    %v220 = vsel %vm219, %v211, %v216
    %v221 = vmul.f32 %v209, %v220
    %v223 = vperm.slane %v168, 0
    %v225 = vmul.f32 %v221, %v223
    %v227 = vperm.slane %v169, 0
    %v229 = vadd.f32 %v225, %v227
    %vm230 = vcmp.ge.f32.partialorder %v229, 0.0
    %v231 = vmul.f32 %v229, 0.1
    %v232 = vsel %vm230, %v229, %v231
    %v233 = vld [vmem:[#allocation7] sm:$0xff]
    %v234 = vld [vmem:[#allocation7 + $0x8] sm:$0xff]
    %v235 = vld [vmem:[#allocation7 + $0x10] sm:$0xff]
    %v236 = vld [vmem:[#allocation7 + $0x18] sm:$0xff]
    %v237 = vld [vmem:[#allocation7 + $0x20] sm:$0xff]
    %v238 = vld [vmem:[#allocation7 + $0x28] sm:$0xff]
    %v239 = vld [vmem:[#allocation7 + $0x30] sm:$0xff]
    %v240 = vld [vmem:[#allocation7 + $0x38] sm:$0xff]
    %v241 = vld [vmem:[#allocation7 + $0x40] sm:$0xff]
    %v242 = vld [vmem:[#allocation7 + $0x48] sm:$0xff]
    %v243 = vld [vmem:[#allocation7 + $0x50] sm:$0xff]
    %v244 = vld [vmem:[#allocation7 + $0x58] sm:$0xff]
    %v245 = vld [vmem:[#allocation7 + $0x60] sm:$0xff]
    %v246 = vld [vmem:[#allocation7 + $0x68] sm:$0xff]
    %v247 = vld [vmem:[#allocation7 + $0x70] sm:$0xff]
    %v248 = vld [vmem:[#allocation7 + $0x78] sm:$0xff]
    %v249 = vld [vmem:[%s5] sm:$0x1]
    %v250 = vld [vmem:[%s6] sm:$0x1]
    %251 = vmatpush.msra.mxu0 %v248
    %252 = vmatpush.msra.mxu0 %v247
    %253 = vmatpush.msra.mxu0 %v246
    %254 = vmatpush.msra.mxu0 %v245
    %255 = vmatpush.msra.mxu0 %v244
    %256 = vmatpush.msra.mxu0 %v243
    %257 = vmatpush.msra.mxu0 %v242
    %258 = vmatpush.msra.mxu0 %v241
    %259 = vmatpush.msra.mxu0 %v240
    %260 = vmatpush.msra.mxu0 %v239
    %261 = vmatpush.msra.mxu0 %v238
    %262 = vmatpush.msra.mxu0 %v237
    %263 = vmatpush.msra.mxu0 %v236
    %264 = vmatpush.msra.mxu0 %v235
    %265 = vmatpush.msra.mxu0 %v234
    %266 = vmatpush.msra.mxu0 %v233
    %267 = vmatmul.f32.gmra.mxu0 %v232
    %v268 = vpop.f32.mrf.mxu0
    %v269 = vadd.f32 0.0, %v268
    %270 = vdwg.mxu0
    %v271 = vmul.f32 %v269, %v151
    %v272 = vrot.slane %v271, 4
    %v273 = vadd.f32 %v271, %v272
    %v274 = vrot.slane %v273, 2
    %v275 = vadd.f32 %v273, %v274
    %v276 = vrot.slane %v275, 1
    %v277 = vadd.f32 %v275, %v276
    %v278 = vmul.f32 %v271, %v269
    %v279 = vrot.slane %v278, 4
    %v280 = vadd.f32 %v278, %v279
    %v281 = vrot.slane %v280, 2
    %v282 = vadd.f32 %v280, %v281
    %v283 = vrot.slane %v282, 1
    %v284 = vadd.f32 %v282, %v283
    %v285 = vmul.f32 %v277, 0.16666667
    %v286 = vmul.f32 %v284, 0.16666667
    %v287 = vmul.f32 %v285, %v285
    %v288 = vsub.f32 %v286, %v287
    %v289 = vmax.f32 %v288, 0.0
    %v290 = vsub.f32 %v269, %v285
    %v291 = vadd.f32 %v289, 1e-05
    %v292 = vrsqrt.pop %v291
    %v293 = vmul.f32 %v292, %v291
    %v294 = vmul.f32 %v293, %v292
    %v295 = vmul.f32 0.5, %v294
    %v296 = vsub.f32 1.5, %v295
    %v297 = vmul.f32 %v292, %v296
    %vm298 = vweird.f32 %v291
    %vm299 = vweird.f32 %v292
    %vm300 = vmor %vm298, %vm299
    %v301 = vsel %vm300, %v292, %v297
    %v302 = vmul.f32 %v290, %v301
    %v304 = vperm.slane %v249, 0
    %v306 = vmul.f32 %v302, %v304
    %v308 = vperm.slane %v250, 0
    %v310 = vadd.f32 %v306, %v308
    %vm311 = vcmp.ge.f32.partialorder %v310, 0.0
    %v312 = vmul.f32 %v310, 0.1
    %v313 = vsel %vm311, %v310, %v312
    %v314 = vld [vmem:[#allocation8] sm:$0xff]
    %v315 = vld [vmem:[#allocation8 + $0x8] sm:$0xff]
    %v316 = vld [vmem:[#allocation8 + $0x10] sm:$0xff]
    %v317 = vld [vmem:[#allocation8 + $0x18] sm:$0xff]
    %v318 = vld [vmem:[#allocation8 + $0x20] sm:$0xff]
    %v319 = vld [vmem:[#allocation8 + $0x28] sm:$0xff]
    %v320 = vld [vmem:[#allocation8 + $0x30] sm:$0xff]
    %v321 = vld [vmem:[#allocation8 + $0x38] sm:$0xff]
    %v322 = vld [vmem:[#allocation8 + $0x40] sm:$0xff]
    %v323 = vld [vmem:[#allocation8 + $0x48] sm:$0xff]
    %v324 = vld [vmem:[#allocation8 + $0x50] sm:$0xff]
    %v325 = vld [vmem:[#allocation8 + $0x58] sm:$0xff]
    %v326 = vld [vmem:[#allocation8 + $0x60] sm:$0xff]
    %v327 = vld [vmem:[#allocation8 + $0x68] sm:$0xff]
    %v328 = vld [vmem:[#allocation8 + $0x70] sm:$0xff]
    %v329 = vld [vmem:[#allocation8 + $0x78] sm:$0xff]
    %v330 = vld [vmem:[%s8] sm:$0x1]
    %v331 = vld [vmem:[%s9] sm:$0x1]
    %332 = vmatpush.msra.mxu0 %v329
    %333 = vmatpush.msra.mxu0 %v328
    %334 = vmatpush.msra.mxu0 %v327
    %335 = vmatpush.msra.mxu0 %v326
    %336 = vmatpush.msra.mxu0 %v325
    %337 = vmatpush.msra.mxu0 %v324
    %338 = vmatpush.msra.mxu0 %v323
    %339 = vmatpush.msra.mxu0 %v322
    %340 = vmatpush.msra.mxu0 %v321
    %341 = vmatpush.msra.mxu0 %v320
    %342 = vmatpush.msra.mxu0 %v319
    %343 = vmatpush.msra.mxu0 %v318
    %344 = vmatpush.msra.mxu0 %v317
    %345 = vmatpush.msra.mxu0 %v316
    %346 = vmatpush.msra.mxu0 %v315
    %347 = vmatpush.msra.mxu0 %v314
    %348 = vmatmul.f32.gmra.mxu0 %v313
    %v349 = vpop.f32.mrf.mxu0
    %v350 = vadd.f32 0.0, %v349
    %351 = vdwg.mxu0
    %v352 = vmul.f32 %v350, %v151
    %v353 = vrot.slane %v352, 4
    %v354 = vadd.f32 %v352, %v353
    %v355 = vrot.slane %v354, 2
    %v356 = vadd.f32 %v354, %v355
    %v357 = vrot.slane %v356, 1
    %v358 = vadd.f32 %v356, %v357
    %v359 = vmul.f32 %v352, %v350
    %v360 = vrot.slane %v359, 4
    %v361 = vadd.f32 %v359, %v360
    %v362 = vrot.slane %v361, 2
    %v363 = vadd.f32 %v361, %v362
    %v364 = vrot.slane %v363, 1
    %v365 = vadd.f32 %v363, %v364
    %v366 = vmul.f32 %v358, 0.16666667
    %v367 = vmul.f32 %v365, 0.16666667
    %v368 = vmul.f32 %v366, %v366
    %v369 = vsub.f32 %v367, %v368
    %v370 = vmax.f32 %v369, 0.0
    %v371 = vsub.f32 %v350, %v366
    %v372 = vadd.f32 %v370, 1e-05
    %v373 = vrsqrt.pop %v372
    %v374 = vmul.f32 %v373, %v372
    %v375 = vmul.f32 %v374, %v373
    %v376 = vmul.f32 0.5, %v375
    %v377 = vsub.f32 1.5, %v376
    %v378 = vmul.f32 %v373, %v377
    %vm379 = vweird.f32 %v372
    %vm380 = vweird.f32 %v373
    %vm381 = vmor %vm379, %vm380
    %v382 = vsel %vm381, %v373, %v378
    %v383 = vmul.f32 %v371, %v382
    %v385 = vperm.slane %v330, 0
    %v387 = vmul.f32 %v383, %v385
    %v389 = vperm.slane %v331, 0
    %v391 = vadd.f32 %v387, %v389
    %vm392 = vcmp.ge.f32.partialorder %v391, 0.0
    %v393 = vmul.f32 %v391, 0.1
    %v394 = vsel %vm392, %v391, %v393
    %v395 = vld [vmem:[#allocation10] sm:$0xff]
    %v396 = vld [vmem:[#allocation10 + $0x8] sm:$0xff]
    %v397 = vld [vmem:[#allocation10 + $0x10] sm:$0xff]
    %v398 = vld [vmem:[#allocation10 + $0x18] sm:$0xff]
    %v399 = vld [vmem:[#allocation10 + $0x20] sm:$0xff]
    %v400 = vld [vmem:[#allocation10 + $0x28] sm:$0xff]
    %v401 = vld [vmem:[#allocation10 + $0x30] sm:$0xff]
    %v402 = vld [vmem:[#allocation10 + $0x38] sm:$0xff]
    %v403 = vld [vmem:[#allocation10 + $0x40] sm:$0xff]
    %v404 = vld [vmem:[#allocation10 + $0x48] sm:$0xff]
    %v405 = vld [vmem:[#allocation10 + $0x50] sm:$0xff]
    %v406 = vld [vmem:[#allocation10 + $0x58] sm:$0xff]
    %v407 = vld [vmem:[#allocation10 + $0x60] sm:$0xff]
    %v408 = vld [vmem:[#allocation10 + $0x68] sm:$0xff]
    %v409 = vld [vmem:[#allocation10 + $0x70] sm:$0xff]
    %v410 = vld [vmem:[#allocation10 + $0x78] sm:$0xff]
    %v411 = vld [vmem:[%s11] sm:$0x1]
    %v412 = vld [vmem:[%s12] sm:$0x1]
    %413 = vmatpush.msra.mxu0 %v410
    %414 = vmatpush.msra.mxu0 %v409
    %415 = vmatpush.msra.mxu0 %v408
    %416 = vmatpush.msra.mxu0 %v407
    %417 = vmatpush.msra.mxu0 %v406
    %418 = vmatpush.msra.mxu0 %v405
    %419 = vmatpush.msra.mxu0 %v404
    %420 = vmatpush.msra.mxu0 %v403
    %421 = vmatpush.msra.mxu0 %v402
    %422 = vmatpush.msra.mxu0 %v401
    %423 = vmatpush.msra.mxu0 %v400
    %424 = vmatpush.msra.mxu0 %v399
    %425 = vmatpush.msra.mxu0 %v398
    %426 = vmatpush.msra.mxu0 %v397
    %427 = vmatpush.msra.mxu0 %v396
    %428 = vmatpush.msra.mxu0 %v395
    %429 = vmatmul.f32.gmra.mxu0 %v394
    %v430 = vpop.f32.mrf.mxu0
    %v431 = vadd.f32 0.0, %v430
    %432 = vdwg.mxu0
    %v433 = vmul.f32 %v431, %v151
    %v434 = vrot.slane %v433, 4
    %v435 = vadd.f32 %v433, %v434
    %v436 = vrot.slane %v435, 2
    %v437 = vadd.f32 %v435, %v436
    %v438 = vrot.slane %v437, 1
    %v439 = vadd.f32 %v437, %v438
    %v440 = vmul.f32 %v433, %v431
    %v441 = vrot.slane %v440, 4
    %v442 = vadd.f32 %v440, %v441
    %v443 = vrot.slane %v442, 2
    %v444 = vadd.f32 %v442, %v443
    %v445 = vrot.slane %v444, 1
    %v446 = vadd.f32 %v444, %v445
    %v447 = vmul.f32 %v439, 0.16666667
    %v448 = vmul.f32 %v446, 0.16666667
    %v449 = vmul.f32 %v447, %v447
    %v450 = vsub.f32 %v448, %v449
    %v451 = vmax.f32 %v450, 0.0
    %v452 = vsub.f32 %v431, %v447
    %v453 = vadd.f32 %v451, 1e-05
    %v454 = vrsqrt.pop %v453
    %v455 = vmul.f32 %v454, %v453
    %v456 = vmul.f32 %v455, %v454
    %v457 = vmul.f32 0.5, %v456
    %v458 = vsub.f32 1.5, %v457
    %v459 = vmul.f32 %v454, %v458
    %vm460 = vweird.f32 %v453
    %vm461 = vweird.f32 %v454
    %vm462 = vmor %vm460, %vm461
    %v463 = vsel %vm462, %v454, %v459
    %v464 = vmul.f32 %v452, %v463
    %v466 = vperm.slane %v411, 0
    %v468 = vmul.f32 %v464, %v466
    %v470 = vperm.slane %v412, 0
    %v472 = vadd.f32 %v468, %v470
    %v473 = vld [vmem:[#allocation11] sm:$0xff]
    %v474 = vld [vmem:[#allocation11 + $0x8] sm:$0xff]
    %v475 = vld [vmem:[#allocation11 + $0x10] sm:$0xff]
    %v476 = vld [vmem:[#allocation11 + $0x18] sm:$0xff]
    %v477 = vld [vmem:[#allocation11 + $0x20] sm:$0xff]
    %v478 = vld [vmem:[#allocation11 + $0x28] sm:$0xff]
    %v479 = vld [vmem:[#allocation11 + $0x30] sm:$0xff]
    %v480 = vld [vmem:[#allocation11 + $0x38] sm:$0xff]
    %v481 = vld [vmem:[#allocation11 + $0x40] sm:$0xff]
    %v482 = vld [vmem:[#allocation11 + $0x48] sm:$0xff]
    %v483 = vld [vmem:[#allocation11 + $0x50] sm:$0xff]
    %v484 = vld [vmem:[#allocation11 + $0x58] sm:$0xff]
    %v485 = vld [vmem:[#allocation11 + $0x60] sm:$0xff]
    %v486 = vld [vmem:[#allocation11 + $0x68] sm:$0xff]
    %v487 = vld [vmem:[#allocation11 + $0x70] sm:$0xff]
    %v488 = vld [vmem:[#allocation11 + $0x78] sm:$0xff]
    %v489 = vld [vmem:[%s14] sm:$0x1]
    %v490 = vld [vmem:[%s15] sm:$0x1]
    %491 = vmatpush.msra.mxu0 %v488
    %492 = vmatpush.msra.mxu0 %v487
    %493 = vmatpush.msra.mxu0 %v486
    %494 = vmatpush.msra.mxu0 %v485
    %495 = vmatpush.msra.mxu0 %v484
    %496 = vmatpush.msra.mxu0 %v483
    %497 = vmatpush.msra.mxu0 %v482
    %498 = vmatpush.msra.mxu0 %v481
    %499 = vmatpush.msra.mxu0 %v480
    %500 = vmatpush.msra.mxu0 %v479
    %501 = vmatpush.msra.mxu0 %v478
    %502 = vmatpush.msra.mxu0 %v477
    %503 = vmatpush.msra.mxu0 %v476
    %504 = vmatpush.msra.mxu0 %v475
    %505 = vmatpush.msra.mxu0 %v474
    %506 = vmatpush.msra.mxu0 %v473
    %507 = vmatmul.f32.gmra.mxu0 %v472
    %v508 = vpop.f32.mrf.mxu0
    %v509 = vadd.f32 0.0, %v508
    %510 = vdwg.mxu0
    %v511 = vmul.f32 %v509, %v151
    %v512 = vrot.slane %v511, 4
    %v513 = vadd.f32 %v511, %v512
    %v514 = vrot.slane %v513, 2
    %v515 = vadd.f32 %v513, %v514
    %v516 = vrot.slane %v515, 1
    %v517 = vadd.f32 %v515, %v516
    %v518 = vmul.f32 %v511, %v509
    %v519 = vrot.slane %v518, 4
    %v520 = vadd.f32 %v518, %v519
    %v521 = vrot.slane %v520, 2
    %v522 = vadd.f32 %v520, %v521
    %v523 = vrot.slane %v522, 1
    %v524 = vadd.f32 %v522, %v523
    %v525 = vmul.f32 %v517, 0.16666667
    %v526 = vmul.f32 %v524, 0.16666667
    %v527 = vmul.f32 %v525, %v525
    %v528 = vsub.f32 %v526, %v527
    %v529 = vmax.f32 %v528, 0.0
    %v530 = vsub.f32 %v509, %v525
    %v531 = vadd.f32 %v529, 1e-05
    %v532 = vrsqrt.pop %v531
    %v533 = vmul.f32 %v532, %v531
    %v534 = vmul.f32 %v533, %v532
    %v535 = vmul.f32 0.5, %v534
    %v536 = vsub.f32 1.5, %v535
    %v537 = vmul.f32 %v532, %v536
    %vm538 = vweird.f32 %v531
    %vm539 = vweird.f32 %v532
    %vm540 = vmor %vm538, %vm539
    %v541 = vsel %vm540, %v532, %v537
    %v542 = vmul.f32 %v530, %v541
    %v544 = vperm.slane %v489, 0
    %v546 = vmul.f32 %v542, %v544
    %v548 = vperm.slane %v490, 0
    %v550 = vadd.f32 %v546, %v548
    %551 = vst [vmem:[#allocation13] sm:$0xff] %v550
    // Predicated region
    $region90: #{tpu_custom_call.1} parent=1 // pred_check
      _
    $region91: #{tpu_custom_call.1} parent=1 // pred_check_branch
      %553 = sbr.rel (0) target = $region93
    $region92: #{tpu_custom_call.1} parent=1 // pred_region
      %555 = vsyncadd [#allocation4], 0
      %s557 = sshll.u32 [#allocation13], 4
      %s558 = int_to_ptr.vmem [resolvable:$true] %s557
      %s559 = sshll.u32 %s16, 4
      %s560 = int_to_ptr.hbm [resolvable:$true] %s559
      %562 = dma.vmem_to_hbm [thread:$0]  %s558, 128, %s560, [#allocation4]
    $region93: #{tpu_custom_call.1} parent=1 // pred_fallthru
      _
    // Predicated region
    $region94: #{tpu_custom_call.1} parent=1 // pred_check
      _
    $region95: #{tpu_custom_call.1} parent=1 // pred_check_branch
      %564 = sbr.rel (0) target = $region97
    $region96: #{tpu_custom_call.1} parent=1 // pred_region
      %566 = dma.done [#allocation4], 128
    $region97: #{tpu_custom_call.1} parent=1 // pred_fallthru
      _
    %567 = vsyncpa [#allocation3], 1
    %568 = vsyncpa [#allocation6], 1
    %569 = vsyncpa [#allocation9], 1
    %570 = vsyncpa [#allocation12], 1
    %571 = vsyncpa [#allocation4], 1

</llo_original>
